<compile_context>
chip_gen: v7x
topology: tpu7x:2x2x1
jax: 0.10.0
libtpu: 0.0.40
codegen_flags: <defaults>
</compile_context>

<pallas_src>
import functools

import jax
import jax.numpy as jnp
from jax import lax
from jax.experimental import pallas as pl
from jax.experimental.pallas import tpu as pltpu


def _conv3x3_bn_relu(x2d, w_flat, scale, bias, H, W):
    """Fused 3x3 conv (pad=1, no bias) + folded BN + ReLU on one (C, H*W) tile.

    x2d:    (Cin, H*W)    float32  activations, spatial flattened on the lane axis
    w_flat: (Cout, 9*Cin) bfloat16 weights, tap-major ((ky,kx) row-major, then Cin)
    scale:  (Cout, 1)     float32  gamma / sqrt(var + eps)
    bias:   (Cout, 1)     float32  beta - mean * scale
    returns (Cout, H*W)   float32
    """
    _, HW = x2d.shape
    col = lax.broadcasted_iota(jnp.int32, (1, HW), 1)
    if W & (W - 1) == 0:                       # power-of-two fast path (no int div)
        py = col >> (W.bit_length() - 1)
        px = col & (W - 1)
    else:
        py = col // W
        px = col % W

    taps = []
    for dy in (-1, 0, 1):
        for dx in (-1, 0, 1):
            shift = (-(dy * W + dx)) % HW
            v = x2d if shift == 0 else pltpu.roll(x2d, shift, 1)
            conds = []
            if dy < 0:
                conds.append(py >= -dy)
            elif dy > 0:
                conds.append(py < H - dy)
            if dx < 0:
                conds.append(px >= -dx)
            elif dx > 0:
                conds.append(px < W - dx)
            if conds:
                valid = functools.reduce(jnp.logical_and, conds)
                v = jnp.where(valid, v, jnp.zeros_like(v))
            taps.append(v)

    patches = jnp.concatenate(taps, axis=0).astype(jnp.bfloat16)      # (9*Cin, H*W)
    acc = jnp.dot(w_flat, patches, preferred_element_type=jnp.float32)  # (Cout, H*W)
    y = acc * scale + bias                                            # lane-broadcast FMA
    return jnp.maximum(y, 0.0)                                        # ReLU, f32


def _cvblock_kernel(H, W, x_ref, w1_ref, s1_ref, b1_ref,
                    w2_ref, s2_ref, b2_ref, o_ref):
    x = x_ref[0]                                                      # (Cin, H*W) f32
    y1 = _conv3x3_bn_relu(x, w1_ref[...], s1_ref[...], b1_ref[...], H, W)
    y2 = _conv3x3_bn_relu(y1, w2_ref[...], s2_ref[...], b2_ref[...], H, W)
    o_ref[...] = y2[None].astype(o_ref.dtype)                         # lane-dense store


def cvblock_forward(x_nchw, params):
    """(Conv2d 3x3 pad=1 no-bias => BN(eval) => ReLU) x 2. NCHW in / NCHW out."""
    N, Cin, H, W = x_nchw.shape
    w1, w2 = params["w1"], params["w2"]                               # OIHW (PyTorch)
    Cout = w1.shape[0]
    HW = H * W

    # Free reshape (contiguous): no data movement, no transposes, no jnp.pad.
    x_flat = x_nchw.reshape(N, Cin, HW)

    # Pre-flatten weights to (Cout, 9*Cin), tap-major, bf16 (MXU-native).
    w1_flat = jnp.transpose(w1, (0, 2, 3, 1)).reshape(Cout, 9 * Cin).astype(jnp.bfloat16)
    w2_flat = jnp.transpose(w2, (0, 2, 3, 1)).reshape(Cout, 9 * Cout).astype(jnp.bfloat16)

    # Folded BN params pre-shaped for the (Cout, H*W) accumulator layout.
    s1 = params["s1"].reshape(Cout, 1).astype(jnp.float32)
    b1 = params["b1"].reshape(Cout, 1).astype(jnp.float32)
    s2 = params["s2"].reshape(Cout, 1).astype(jnp.float32)
    b2 = params["b2"].reshape(Cout, 1).astype(jnp.float32)

    kernel = functools.partial(_cvblock_kernel, H, W)
    rep = lambda n: (0, 0)                                            # replicated blocks

    out_flat = pl.pallas_call(
        kernel,
        out_shape=jax.ShapeDtypeStruct((N, Cout, HW), x_nchw.dtype),
        grid_spec=pltpu.PrefetchScalarGridSpec(
            num_scalar_prefetch=0,
            grid=(N,),
            in_specs=[
                pl.BlockSpec((1, Cin, HW), lambda n: (n, 0, 0)),
                pl.BlockSpec((Cout, 9 * Cin), rep),
                pl.BlockSpec((Cout, 1), rep),
                pl.BlockSpec((Cout, 1), rep),
                pl.BlockSpec((Cout, 9 * Cout), rep),
                pl.BlockSpec((Cout, 1), rep),
                pl.BlockSpec((Cout, 1), rep),
            ],
            out_specs=pl.BlockSpec((1, Cout, HW), lambda n: (n, 0, 0)),
        ),
        compiler_params=pltpu.CompilerParams(
            dimension_semantics=("parallel",)),
    )(x_flat, w1_flat, s1, b1, w2_flat, s2, b2)

    return out_flat.reshape(N, Cout, H, W)


def init_cvblock_params(key, in_ch, out_ch, eps=1e-5):
    """Deterministic synthetic CvBlock parameters (eval-mode BN folded)."""
    k1, k2, k3, k4, k5, k6 = jax.random.split(key, 6)

    def conv_w(k, cin, cout):
        w = jax.random.normal(k, (cout, cin, 3, 3), jnp.float32)      # OIHW
        return w * (2.0 / (9.0 * cin)) ** 0.5

    def bn_fold(kg, kb, c):
        gamma = 1.0 + 0.1 * jax.random.normal(kg, (c,), jnp.float32)
        beta = 0.1 * jax.random.normal(kb, (c,), jnp.float32)
        running_mean = jnp.zeros((c,), jnp.float32)
        running_var = jnp.ones((c,), jnp.float32)
        scale = gamma / jnp.sqrt(running_var + eps)
        bias = beta - running_mean * scale
        return scale, bias

    w1 = conv_w(k1, in_ch, out_ch)
    s1, b1 = bn_fold(k2, k3, out_ch)
    w2 = conv_w(k4, out_ch, out_ch)
    s2, b2 = bn_fold(k5, k6, out_ch)
    return dict(w1=w1, s1=s1, b1=b1, w2=w2, s2=s2, b2=b2)


def _reference_forward(x_nchw, params):
    """Plain-JAX f32 reference (lax.conv) for correctness checking."""
    def step(x, w, s, b):
        y = lax.conv_general_dilated(
            x, w, window_strides=(1, 1), padding="SAME",
            dimension_numbers=("NCHW", "OIHW", "NCHW"))
        y = y * s[None, :, None, None] + b[None, :, None, None]
        return jnp.maximum(y, 0.0)

    y = step(x_nchw, params["w1"], params["s1"], params["b1"])
    return step(y, params["w2"], params["s2"], params["b2"])


if __name__ == "__main__":
    key = jax.random.PRNGKey(0)
    kx, kp = jax.random.split(key)

    N, Cin, Cout, H, W = 2, 4, 8, 16, 16
    x = jax.random.normal(kx, (N, Cin, H, W), jnp.float32)
    params = init_cvblock_params(kp, Cin, Cout)

    out = jax.jit(cvblock_forward)(x, params)
    out = jax.block_until_ready(out)

    ref = _reference_forward(x, params)
    assert out.shape == (N, Cout, H, W)
    # bf16 MXU path (f32 accumulate/epilogue): looser tolerance than the pure-f32 ref.
    assert jnp.allclose(out, ref, rtol=5e-2, atol=5e-2), \
        float(jnp.max(jnp.abs(out - ref)))

    print("KERNEL_OK")
</pallas_src>

<mosaic_0001>
module attributes {stable_mosaic.version = 11 : i64} {
  func.func @_cvblock_kernel(%arg0: i32, %arg1: memref<1x4x256xf32, #tpu.memory_space<vmem>>, %arg2: memref<8x36xbf16, #tpu.memory_space<vmem>>, %arg3: memref<8x1xf32, #tpu.memory_space<vmem>>, %arg4: memref<8x1xf32, #tpu.memory_space<vmem>>, %arg5: memref<8x72xbf16, #tpu.memory_space<vmem>>, %arg6: memref<8x1xf32, #tpu.memory_space<vmem>>, %arg7: memref<8x1xf32, #tpu.memory_space<vmem>>, %arg8: memref<1x8x256xf32, #tpu.memory_space<vmem>>) attributes {dimension_semantics = [#tpu.dimension_semantics<parallel>], iteration_bounds = array<i64: 2>, scalar_prefetch = 0 : i64, scratch_operands = 0 : i64, tpu.core_type = #tpu.core_type<tc>, window_params = [{transform_indices = @transform_0, window_bounds = array<i64: 1, 4, 256>}, {pipeline_mode = #tpu.pipeline_mode<synchronous>, transform_indices = @transform_1, window_bounds = array<i64: 8, 36>}, {pipeline_mode = #tpu.pipeline_mode<synchronous>, transform_indices = @transform_2, window_bounds = array<i64: 8, 1>}, {pipeline_mode = #tpu.pipeline_mode<synchronous>, transform_indices = @transform_3, window_bounds = array<i64: 8, 1>}, {pipeline_mode = #tpu.pipeline_mode<synchronous>, transform_indices = @transform_4, window_bounds = array<i64: 8, 72>}, {pipeline_mode = #tpu.pipeline_mode<synchronous>, transform_indices = @transform_5, window_bounds = array<i64: 8, 1>}, {pipeline_mode = #tpu.pipeline_mode<synchronous>, transform_indices = @transform_6, window_bounds = array<i64: 8, 1>}, {transform_indices = @transform_7, window_bounds = array<i64: 1, 8, 256>}]} {
    %c0 = arith.constant 0 : index
    %c0_0 = arith.constant 0 : index
    %c0_1 = arith.constant 0 : index
    %0 = vector.load %arg1[%c0, %c0_0, %c0_1] : memref<1x4x256xf32, #tpu.memory_space<vmem>>, vector<1x4x256xf32>
    %1 = vector.shape_cast %0 : vector<1x4x256xf32> to vector<4x256xf32>
    %c0_2 = arith.constant 0 : index
    %c0_3 = arith.constant 0 : index
    %2 = vector.load %arg2[%c0_2, %c0_3] : memref<8x36xbf16, #tpu.memory_space<vmem>>, vector<8x36xbf16>
    %c0_4 = arith.constant 0 : index
    %c0_5 = arith.constant 0 : index
    %3 = vector.load %arg3[%c0_4, %c0_5] : memref<8x1xf32, #tpu.memory_space<vmem>>, vector<8x1xf32>
    %c0_6 = arith.constant 0 : index
    %c0_7 = arith.constant 0 : index
    %4 = vector.load %arg4[%c0_6, %c0_7] : memref<8x1xf32, #tpu.memory_space<vmem>>, vector<8x1xf32>
    %5 = tpu.iota {dimensions = array<i32: 1>} : vector<1x256xi32>
    %c4_i32 = arith.constant 4 : i32
    %6 = vector.broadcast %c4_i32 : i32 to vector<1x256xi32>
    %7 = arith.shrsi %5, %6 : vector<1x256xi32>
    %c15_i32 = arith.constant 15 : i32
    %8 = vector.broadcast %c15_i32 : i32 to vector<1x256xi32>
    %9 = arith.andi %5, %8 : vector<1x256xi32>
    %c17_i32 = arith.constant 17 : i32
    %10 = tpu.dynamic_rotate %1 by %c17_i32 dim 1 : vector<4x256xf32>, i32 -> vector<4x256xf32>
    %c1_i32 = arith.constant 1 : i32
    %11 = vector.broadcast %c1_i32 : i32 to vector<1x256xi32>
    %12 = arith.cmpi sge, %7, %11 : vector<1x256xi32>
    %c1_i32_8 = arith.constant 1 : i32
    %13 = vector.broadcast %c1_i32_8 : i32 to vector<1x256xi32>
    %14 = arith.cmpi sge, %9, %13 : vector<1x256xi32>
    %15 = arith.andi %12, %14 : vector<1x256xi1>
    %cst = arith.constant 0.000000e+00 : f32
    %16 = vector.broadcast %cst : f32 to vector<4x256xf32>
    %17 = vector.shape_cast %15 : vector<1x256xi1> to vector<1x256xi1>
    %18 = vector.broadcast %17 : vector<1x256xi1> to vector<4x256xi1>
    %19 = arith.select %18, %10, %16 : vector<4x256xi1>, vector<4x256xf32>
    %c16_i32 = arith.constant 16 : i32
    %20 = tpu.dynamic_rotate %1 by %c16_i32 dim 1 : vector<4x256xf32>, i32 -> vector<4x256xf32>
    %c1_i32_9 = arith.constant 1 : i32
    %21 = vector.broadcast %c1_i32_9 : i32 to vector<1x256xi32>
    %22 = arith.cmpi sge, %7, %21 : vector<1x256xi32>
    %cst_10 = arith.constant 0.000000e+00 : f32
    %23 = vector.broadcast %cst_10 : f32 to vector<4x256xf32>
    %24 = vector.shape_cast %22 : vector<1x256xi1> to vector<1x256xi1>
    %25 = vector.broadcast %24 : vector<1x256xi1> to vector<4x256xi1>
    %26 = arith.select %25, %20, %23 : vector<4x256xi1>, vector<4x256xf32>
    %c15_i32_11 = arith.constant 15 : i32
    %27 = tpu.dynamic_rotate %1 by %c15_i32_11 dim 1 : vector<4x256xf32>, i32 -> vector<4x256xf32>
    %c1_i32_12 = arith.constant 1 : i32
    %28 = vector.broadcast %c1_i32_12 : i32 to vector<1x256xi32>
    %29 = arith.cmpi sge, %7, %28 : vector<1x256xi32>
    %c15_i32_13 = arith.constant 15 : i32
    %30 = vector.broadcast %c15_i32_13 : i32 to vector<1x256xi32>
    %31 = arith.cmpi slt, %9, %30 : vector<1x256xi32>
    %32 = arith.andi %29, %31 : vector<1x256xi1>
    %cst_14 = arith.constant 0.000000e+00 : f32
    %33 = vector.broadcast %cst_14 : f32 to vector<4x256xf32>
    %34 = vector.shape_cast %32 : vector<1x256xi1> to vector<1x256xi1>
    %35 = vector.broadcast %34 : vector<1x256xi1> to vector<4x256xi1>
    %36 = arith.select %35, %27, %33 : vector<4x256xi1>, vector<4x256xf32>
    %c1_i32_15 = arith.constant 1 : i32
    %37 = tpu.dynamic_rotate %1 by %c1_i32_15 dim 1 : vector<4x256xf32>, i32 -> vector<4x256xf32>
    %c1_i32_16 = arith.constant 1 : i32
    %38 = vector.broadcast %c1_i32_16 : i32 to vector<1x256xi32>
    %39 = arith.cmpi sge, %9, %38 : vector<1x256xi32>
    %cst_17 = arith.constant 0.000000e+00 : f32
    %40 = vector.broadcast %cst_17 : f32 to vector<4x256xf32>
    %41 = vector.shape_cast %39 : vector<1x256xi1> to vector<1x256xi1>
    %42 = vector.broadcast %41 : vector<1x256xi1> to vector<4x256xi1>
    %43 = arith.select %42, %37, %40 : vector<4x256xi1>, vector<4x256xf32>
    %c255_i32 = arith.constant 255 : i32
    %44 = tpu.dynamic_rotate %1 by %c255_i32 dim 1 : vector<4x256xf32>, i32 -> vector<4x256xf32>
    %c15_i32_18 = arith.constant 15 : i32
    %45 = vector.broadcast %c15_i32_18 : i32 to vector<1x256xi32>
    %46 = arith.cmpi slt, %9, %45 : vector<1x256xi32>
    %cst_19 = arith.constant 0.000000e+00 : f32
    %47 = vector.broadcast %cst_19 : f32 to vector<4x256xf32>
    %48 = vector.shape_cast %46 : vector<1x256xi1> to vector<1x256xi1>
    %49 = vector.broadcast %48 : vector<1x256xi1> to vector<4x256xi1>
    %50 = arith.select %49, %44, %47 : vector<4x256xi1>, vector<4x256xf32>
    %c241_i32 = arith.constant 241 : i32
    %51 = tpu.dynamic_rotate %1 by %c241_i32 dim 1 : vector<4x256xf32>, i32 -> vector<4x256xf32>
    %c15_i32_20 = arith.constant 15 : i32
    %52 = vector.broadcast %c15_i32_20 : i32 to vector<1x256xi32>
    %53 = arith.cmpi slt, %7, %52 : vector<1x256xi32>
    %c1_i32_21 = arith.constant 1 : i32
    %54 = vector.broadcast %c1_i32_21 : i32 to vector<1x256xi32>
    %55 = arith.cmpi sge, %9, %54 : vector<1x256xi32>
    %56 = arith.andi %53, %55 : vector<1x256xi1>
    %cst_22 = arith.constant 0.000000e+00 : f32
    %57 = vector.broadcast %cst_22 : f32 to vector<4x256xf32>
    %58 = vector.shape_cast %56 : vector<1x256xi1> to vector<1x256xi1>
    %59 = vector.broadcast %58 : vector<1x256xi1> to vector<4x256xi1>
    %60 = arith.select %59, %51, %57 : vector<4x256xi1>, vector<4x256xf32>
    %c240_i32 = arith.constant 240 : i32
    %61 = tpu.dynamic_rotate %1 by %c240_i32 dim 1 : vector<4x256xf32>, i32 -> vector<4x256xf32>
    %c15_i32_23 = arith.constant 15 : i32
    %62 = vector.broadcast %c15_i32_23 : i32 to vector<1x256xi32>
    %63 = arith.cmpi slt, %7, %62 : vector<1x256xi32>
    %cst_24 = arith.constant 0.000000e+00 : f32
    %64 = vector.broadcast %cst_24 : f32 to vector<4x256xf32>
    %65 = vector.shape_cast %63 : vector<1x256xi1> to vector<1x256xi1>
    %66 = vector.broadcast %65 : vector<1x256xi1> to vector<4x256xi1>
    %67 = arith.select %66, %61, %64 : vector<4x256xi1>, vector<4x256xf32>
    %c239_i32 = arith.constant 239 : i32
    %68 = tpu.dynamic_rotate %1 by %c239_i32 dim 1 : vector<4x256xf32>, i32 -> vector<4x256xf32>
    %c15_i32_25 = arith.constant 15 : i32
    %69 = vector.broadcast %c15_i32_25 : i32 to vector<1x256xi32>
    %70 = arith.cmpi slt, %7, %69 : vector<1x256xi32>
    %c15_i32_26 = arith.constant 15 : i32
    %71 = vector.broadcast %c15_i32_26 : i32 to vector<1x256xi32>
    %72 = arith.cmpi slt, %9, %71 : vector<1x256xi32>
    %73 = arith.andi %70, %72 : vector<1x256xi1>
    %cst_27 = arith.constant 0.000000e+00 : f32
    %74 = vector.broadcast %cst_27 : f32 to vector<4x256xf32>
    %75 = vector.shape_cast %73 : vector<1x256xi1> to vector<1x256xi1>
    %76 = vector.broadcast %75 : vector<1x256xi1> to vector<4x256xi1>
    %77 = arith.select %76, %68, %74 : vector<4x256xi1>, vector<4x256xf32>
    %78 = tpu.concatenate %19, %26, %36, %43, %1, %50, %60, %67, %77 in 0 : vector<4x256xf32>, vector<4x256xf32>, vector<4x256xf32>, vector<4x256xf32>, vector<4x256xf32>, vector<4x256xf32>, vector<4x256xf32>, vector<4x256xf32>, vector<4x256xf32> -> vector<36x256xf32>
    %79 = arith.truncf %78 : vector<36x256xf32> to vector<36x256xbf16>
    %cst_28 = arith.constant dense<0.000000e+00> : vector<8x256xf32>
    %80 = tpu.matmul %2, %79, %cst_28 {dimension_numbers = #tpu.dot_dimension_numbers<[1], [0], [0], [1], [0, 0, 1, 1], [], []>} : vector<8x36xbf16>, vector<36x256xbf16>, vector<8x256xf32> -> vector<8x256xf32>
    %81 = vector.broadcast %3 : vector<8x1xf32> to vector<8x256xf32>
    %82 = arith.mulf %80, %81 : vector<8x256xf32>
    %83 = vector.broadcast %4 : vector<8x1xf32> to vector<8x256xf32>
    %84 = arith.addf %82, %83 : vector<8x256xf32>
    %cst_29 = arith.constant 0.000000e+00 : f32
    %85 = vector.broadcast %cst_29 : f32 to vector<8x256xf32>
    %86 = arith.maximumf %84, %85 : vector<8x256xf32>
    %c0_30 = arith.constant 0 : index
    %c0_31 = arith.constant 0 : index
    %87 = vector.load %arg5[%c0_30, %c0_31] : memref<8x72xbf16, #tpu.memory_space<vmem>>, vector<8x72xbf16>
    %c0_32 = arith.constant 0 : index
    %c0_33 = arith.constant 0 : index
    %88 = vector.load %arg6[%c0_32, %c0_33] : memref<8x1xf32, #tpu.memory_space<vmem>>, vector<8x1xf32>
    %c0_34 = arith.constant 0 : index
    %c0_35 = arith.constant 0 : index
    %89 = vector.load %arg7[%c0_34, %c0_35] : memref<8x1xf32, #tpu.memory_space<vmem>>, vector<8x1xf32>
    %90 = tpu.iota {dimensions = array<i32: 1>} : vector<1x256xi32>
    %c4_i32_36 = arith.constant 4 : i32
    %91 = vector.broadcast %c4_i32_36 : i32 to vector<1x256xi32>
    %92 = arith.shrsi %90, %91 : vector<1x256xi32>
    %c15_i32_37 = arith.constant 15 : i32
    %93 = vector.broadcast %c15_i32_37 : i32 to vector<1x256xi32>
    %94 = arith.andi %90, %93 : vector<1x256xi32>
    %c17_i32_38 = arith.constant 17 : i32
    %95 = tpu.dynamic_rotate %86 by %c17_i32_38 dim 1 : vector<8x256xf32>, i32 -> vector<8x256xf32>
    %c1_i32_39 = arith.constant 1 : i32
    %96 = vector.broadcast %c1_i32_39 : i32 to vector<1x256xi32>
    %97 = arith.cmpi sge, %92, %96 : vector<1x256xi32>
    %c1_i32_40 = arith.constant 1 : i32
    %98 = vector.broadcast %c1_i32_40 : i32 to vector<1x256xi32>
    %99 = arith.cmpi sge, %94, %98 : vector<1x256xi32>
    %100 = arith.andi %97, %99 : vector<1x256xi1>
    %cst_41 = arith.constant 0.000000e+00 : f32
    %101 = vector.broadcast %cst_41 : f32 to vector<8x256xf32>
    %102 = vector.shape_cast %100 : vector<1x256xi1> to vector<1x256xi1>
    %103 = vector.broadcast %102 : vector<1x256xi1> to vector<8x256xi1>
    %104 = arith.select %103, %95, %101 : vector<8x256xi1>, vector<8x256xf32>
    %c16_i32_42 = arith.constant 16 : i32
    %105 = tpu.dynamic_rotate %86 by %c16_i32_42 dim 1 : vector<8x256xf32>, i32 -> vector<8x256xf32>
    %c1_i32_43 = arith.constant 1 : i32
    %106 = vector.broadcast %c1_i32_43 : i32 to vector<1x256xi32>
    %107 = arith.cmpi sge, %92, %106 : vector<1x256xi32>
    %cst_44 = arith.constant 0.000000e+00 : f32
    %108 = vector.broadcast %cst_44 : f32 to vector<8x256xf32>
    %109 = vector.shape_cast %107 : vector<1x256xi1> to vector<1x256xi1>
    %110 = vector.broadcast %109 : vector<1x256xi1> to vector<8x256xi1>
    %111 = arith.select %110, %105, %108 : vector<8x256xi1>, vector<8x256xf32>
    %c15_i32_45 = arith.constant 15 : i32
    %112 = tpu.dynamic_rotate %86 by %c15_i32_45 dim 1 : vector<8x256xf32>, i32 -> vector<8x256xf32>
    %c1_i32_46 = arith.constant 1 : i32
    %113 = vector.broadcast %c1_i32_46 : i32 to vector<1x256xi32>
    %114 = arith.cmpi sge, %92, %113 : vector<1x256xi32>
    %c15_i32_47 = arith.constant 15 : i32
    %115 = vector.broadcast %c15_i32_47 : i32 to vector<1x256xi32>
    %116 = arith.cmpi slt, %94, %115 : vector<1x256xi32>
    %117 = arith.andi %114, %116 : vector<1x256xi1>
    %cst_48 = arith.constant 0.000000e+00 : f32
    %118 = vector.broadcast %cst_48 : f32 to vector<8x256xf32>
    %119 = vector.shape_cast %117 : vector<1x256xi1> to vector<1x256xi1>
    %120 = vector.broadcast %119 : vector<1x256xi1> to vector<8x256xi1>
    %121 = arith.select %120, %112, %118 : vector<8x256xi1>, vector<8x256xf32>
    %c1_i32_49 = arith.constant 1 : i32
    %122 = tpu.dynamic_rotate %86 by %c1_i32_49 dim 1 : vector<8x256xf32>, i32 -> vector<8x256xf32>
    %c1_i32_50 = arith.constant 1 : i32
    %123 = vector.broadcast %c1_i32_50 : i32 to vector<1x256xi32>
    %124 = arith.cmpi sge, %94, %123 : vector<1x256xi32>
    %cst_51 = arith.constant 0.000000e+00 : f32
    %125 = vector.broadcast %cst_51 : f32 to vector<8x256xf32>
    %126 = vector.shape_cast %124 : vector<1x256xi1> to vector<1x256xi1>
    %127 = vector.broadcast %126 : vector<1x256xi1> to vector<8x256xi1>
    %128 = arith.select %127, %122, %125 : vector<8x256xi1>, vector<8x256xf32>
    %c255_i32_52 = arith.constant 255 : i32
    %129 = tpu.dynamic_rotate %86 by %c255_i32_52 dim 1 : vector<8x256xf32>, i32 -> vector<8x256xf32>
    %c15_i32_53 = arith.constant 15 : i32
    %130 = vector.broadcast %c15_i32_53 : i32 to vector<1x256xi32>
    %131 = arith.cmpi slt, %94, %130 : vector<1x256xi32>
    %cst_54 = arith.constant 0.000000e+00 : f32
    %132 = vector.broadcast %cst_54 : f32 to vector<8x256xf32>
    %133 = vector.shape_cast %131 : vector<1x256xi1> to vector<1x256xi1>
    %134 = vector.broadcast %133 : vector<1x256xi1> to vector<8x256xi1>
    %135 = arith.select %134, %129, %132 : vector<8x256xi1>, vector<8x256xf32>
    %c241_i32_55 = arith.constant 241 : i32
    %136 = tpu.dynamic_rotate %86 by %c241_i32_55 dim 1 : vector<8x256xf32>, i32 -> vector<8x256xf32>
    %c15_i32_56 = arith.constant 15 : i32
    %137 = vector.broadcast %c15_i32_56 : i32 to vector<1x256xi32>
    %138 = arith.cmpi slt, %92, %137 : vector<1x256xi32>
    %c1_i32_57 = arith.constant 1 : i32
    %139 = vector.broadcast %c1_i32_57 : i32 to vector<1x256xi32>
    %140 = arith.cmpi sge, %94, %139 : vector<1x256xi32>
    %141 = arith.andi %138, %140 : vector<1x256xi1>
    %cst_58 = arith.constant 0.000000e+00 : f32
    %142 = vector.broadcast %cst_58 : f32 to vector<8x256xf32>
    %143 = vector.shape_cast %141 : vector<1x256xi1> to vector<1x256xi1>
    %144 = vector.broadcast %143 : vector<1x256xi1> to vector<8x256xi1>
    %145 = arith.select %144, %136, %142 : vector<8x256xi1>, vector<8x256xf32>
    %c240_i32_59 = arith.constant 240 : i32
    %146 = tpu.dynamic_rotate %86 by %c240_i32_59 dim 1 : vector<8x256xf32>, i32 -> vector<8x256xf32>
    %c15_i32_60 = arith.constant 15 : i32
    %147 = vector.broadcast %c15_i32_60 : i32 to vector<1x256xi32>
    %148 = arith.cmpi slt, %92, %147 : vector<1x256xi32>
    %cst_61 = arith.constant 0.000000e+00 : f32
    %149 = vector.broadcast %cst_61 : f32 to vector<8x256xf32>
    %150 = vector.shape_cast %148 : vector<1x256xi1> to vector<1x256xi1>
    %151 = vector.broadcast %150 : vector<1x256xi1> to vector<8x256xi1>
    %152 = arith.select %151, %146, %149 : vector<8x256xi1>, vector<8x256xf32>
    %c239_i32_62 = arith.constant 239 : i32
    %153 = tpu.dynamic_rotate %86 by %c239_i32_62 dim 1 : vector<8x256xf32>, i32 -> vector<8x256xf32>
    %c15_i32_63 = arith.constant 15 : i32
    %154 = vector.broadcast %c15_i32_63 : i32 to vector<1x256xi32>
    %155 = arith.cmpi slt, %92, %154 : vector<1x256xi32>
    %c15_i32_64 = arith.constant 15 : i32
    %156 = vector.broadcast %c15_i32_64 : i32 to vector<1x256xi32>
    %157 = arith.cmpi slt, %94, %156 : vector<1x256xi32>
    %158 = arith.andi %155, %157 : vector<1x256xi1>
    %cst_65 = arith.constant 0.000000e+00 : f32
    %159 = vector.broadcast %cst_65 : f32 to vector<8x256xf32>
    %160 = vector.shape_cast %158 : vector<1x256xi1> to vector<1x256xi1>
    %161 = vector.broadcast %160 : vector<1x256xi1> to vector<8x256xi1>
    %162 = arith.select %161, %153, %159 : vector<8x256xi1>, vector<8x256xf32>
    %163 = tpu.concatenate %104, %111, %121, %128, %86, %135, %145, %152, %162 in 0 : vector<8x256xf32>, vector<8x256xf32>, vector<8x256xf32>, vector<8x256xf32>, vector<8x256xf32>, vector<8x256xf32>, vector<8x256xf32>, vector<8x256xf32>, vector<8x256xf32> -> vector<72x256xf32>
    %164 = arith.truncf %163 : vector<72x256xf32> to vector<72x256xbf16>
    %cst_66 = arith.constant dense<0.000000e+00> : vector<8x256xf32>
    %165 = tpu.matmul %87, %164, %cst_66 {dimension_numbers = #tpu.dot_dimension_numbers<[1], [0], [0], [1], [0, 0, 1, 1], [], []>} : vector<8x72xbf16>, vector<72x256xbf16>, vector<8x256xf32> -> vector<8x256xf32>
    %166 = vector.broadcast %88 : vector<8x1xf32> to vector<8x256xf32>
    %167 = arith.mulf %165, %166 : vector<8x256xf32>
    %168 = vector.broadcast %89 : vector<8x1xf32> to vector<8x256xf32>
    %169 = arith.addf %167, %168 : vector<8x256xf32>
    %cst_67 = arith.constant 0.000000e+00 : f32
    %170 = vector.broadcast %cst_67 : f32 to vector<8x256xf32>
    %171 = arith.maximumf %169, %170 : vector<8x256xf32>
    %172 = vector.shape_cast %171 : vector<8x256xf32> to vector<1x8x256xf32>
    %c0_68 = arith.constant 0 : index
    %c0_69 = arith.constant 0 : index
    %c0_70 = arith.constant 0 : index
    %173 = vector.load %arg8[%c0_68, %c0_69, %c0_70] : memref<1x8x256xf32, #tpu.memory_space<vmem>>, vector<1x8x256xf32>
    tpu.vector_store %arg8[%c0_68, %c0_69, %c0_70], %172 {strides = array<i32>} : memref<1x8x256xf32, #tpu.memory_space<vmem>>, vector<1x8x256xf32>,
    return
  }
  func.func @transform_0(%arg0: i32) -> (i32, i32, i32) {
    %c0_i32 = arith.constant 0 : i32
    %c0_i32_0 = arith.constant 0 : i32
    %c0_i32_1 = arith.constant 0 : i32
    return %arg0, %c0_i32, %c0_i32_0 : i32, i32, i32
  }
  func.func @transform_1(%arg0: i32) -> (i32, i32) {
    %c0_i32 = arith.constant 0 : i32
    %c0_i32_0 = arith.constant 0 : i32
    %c0_i32_1 = arith.constant 0 : i32
    return %c0_i32, %c0_i32_0 : i32, i32
  }
  func.func @transform_2(%arg0: i32) -> (i32, i32) {
    %c0_i32 = arith.constant 0 : i32
    %c0_i32_0 = arith.constant 0 : i32
    %c0_i32_1 = arith.constant 0 : i32
    return %c0_i32, %c0_i32_0 : i32, i32
  }
  func.func @transform_3(%arg0: i32) -> (i32, i32) {
    %c0_i32 = arith.constant 0 : i32
    %c0_i32_0 = arith.constant 0 : i32
    %c0_i32_1 = arith.constant 0 : i32
    return %c0_i32, %c0_i32_0 : i32, i32
  }
  func.func @transform_4(%arg0: i32) -> (i32, i32) {
    %c0_i32 = arith.constant 0 : i32
    %c0_i32_0 = arith.constant 0 : i32
    %c0_i32_1 = arith.constant 0 : i32
    return %c0_i32, %c0_i32_0 : i32, i32
  }
  func.func @transform_5(%arg0: i32) -> (i32, i32) {
    %c0_i32 = arith.constant 0 : i32
    %c0_i32_0 = arith.constant 0 : i32
    %c0_i32_1 = arith.constant 0 : i32
    return %c0_i32, %c0_i32_0 : i32, i32
  }
  func.func @transform_6(%arg0: i32) -> (i32, i32) {
    %c0_i32 = arith.constant 0 : i32
    %c0_i32_0 = arith.constant 0 : i32
    %c0_i32_1 = arith.constant 0 : i32
    return %c0_i32, %c0_i32_0 : i32, i32
  }
  func.func @transform_7(%arg0: i32) -> (i32, i32, i32) {
    %c0_i32 = arith.constant 0 : i32
    %c0_i32_0 = arith.constant 0 : i32
    %c0_i32_1 = arith.constant 0 : i32
    return %arg0, %c0_i32, %c0_i32_0 : i32, i32, i32
  }
}

</mosaic_0001>

<llo_original>
// kernel: cvblock_forward.1
$region0: #{cvblock_forward.1}
  #allocation0 [shape = 'u32[]', space=smem, size = 0x4, offset = 0x4, fixed_abs, tag = 'smem constant byte address 0x4 - core index']
  #allocation1 [shape = 'u32[144,128]{1,0:T(1,128)}', space=vmem, size = 0x12000, scoped, tag = 'internal scratch']
  %s0 = inlined_call_operand.vmem [shape: f32[2,4,256], index: 0, kind: input, shape index: {}]
  %s1 = inlined_call_operand.vmem [shape: bf16[8,36], index: 1, kind: input, shape index: {}]
  %s2 = inlined_call_operand.vmem [shape: f32[8,1], index: 2, kind: input, shape index: {}]
  %s3 = inlined_call_operand.vmem [shape: f32[8,1], index: 3, kind: input, shape index: {}]
  %s4 = inlined_call_operand.vmem [shape: bf16[8,72], index: 4, kind: input, shape index: {}]
  %s5 = inlined_call_operand.vmem [shape: f32[8,1], index: 5, kind: input, shape index: {}]
  %s6 = inlined_call_operand.vmem [shape: f32[8,1], index: 6, kind: input, shape index: {}]
  %s7 = inlined_call_operand.vmem [shape: f32[2,8,256], index: 7, kind: output, shape index: {}]
  %s8 = sld [smem:[#allocation0]]
  $region61: #{cvblock_forward.1} parent=0
    _
  %s10 = ssub.s32 1, %s8
  %s11 = scalar_select 0, %s10, %s8
  loop: start=0, step=1, limit=4
  $region2: #{cvblock_forward.1} parent=0 // loop_pre_header
    _
  $region3: #{cvblock_forward.1} parent=0 // loop_header
    %s13 = sphi 0, %s17
    %p14 = scmp.ge.s32.totalorder %s13, 4
    %s23 = sphi 0, %s25
    %s26 = sphi 0, %s23
    %s27 = sphi 0, %s26
    %s43 = sphi 0, %s27
    %s47 = sphi 0, %s47
    %s49 = sphi 0, %s47
    %s50 = sphi 0, %s49
    %s64 = sphi 0, %s50
    %s68 = sphi 0, %s68
    %s70 = sphi 0, %s68
    %s71 = sphi 0, %s70
    %s85 = sphi 0, %s71
    %s89 = sphi 0, %s89
    %s91 = sphi 0, %s89
    %s92 = sphi 0, %s91
    %s106 = sphi 0, %s92
    %s110 = sphi 0, %s110
    %s112 = sphi 0, %s110
    %s113 = sphi 0, %s112
    %s127 = sphi 0, %s113
    %s131 = sphi 0, %s131
    %s133 = sphi 0, %s131
    %s134 = sphi 0, %s133
    %s148 = sphi 0, %s134
    %s152 = sphi 0, %s152
    %s154 = sphi 0, %s152
    %s155 = sphi 0, %s154
    %s169 = sphi 0, %s155
    %s175 = sphi 0, %s177
    %s178 = sphi 0, %s175
    %s179 = sphi 0, %s178
    %s195 = sphi 0, %s179
  $region4: #{cvblock_forward.1} parent=0 // loop_header_branch
    %16 = sbr.rel (%p14) target = $region8
  $region5: #{cvblock_forward.1} parent=0 // loop_body
    %s18 = ssub.s32 %s13, 1
    %s19 = ssub.s32 %s13, 2
    %s20 = sadd.s32 %s13, 1
    %s21 = ssub.s32 %s13, %s20
    %p22 = scmp.eq.s32.totalorder %s21, 0
    %s24 = sadd.s32 %s23, 1
    %s25 = scalar_select %p22, %s23, %s24
    %p28 = pneg %p22
    %p29 = scmp.eq.s32.totalorder %s13, 1
    %p30 = por %p28, %p29
    %p31 = scmp.ne.s32.totalorder %s23, %s26
    %p32 = scmp.eq.s32.totalorder %s13, 0
    %p33 = por %p31, %p32
    %p34 = scmp.ne.s32.totalorder %s23, %s26
    %p35 = scmp.eq.s32.totalorder %s18, 1
    %p36 = por %p34, %p35
    %p37 = scmp.ne.s32.totalorder %s26, %s27
    %p38 = scmp.eq.s32.totalorder %s18, 0
    %p39 = por %p37, %p38
    %p40 = scmp.ne.s32.totalorder %s26, %s27
    %p41 = scmp.eq.s32.totalorder %s19, 1
    %p42 = por %p40, %p41
    %p44 = scmp.ne.s32.totalorder %s27, %s43
    %p45 = scmp.eq.s32.totalorder %s19, 0
    %p46 = por %p44, %p45
    %s48 = sadd.s32 %s47, 1
    %p51 = scmp.eq.s32.totalorder %s13, 1
    %p52 = scmp.ne.s32.totalorder %s47, %s49
    %p53 = scmp.eq.s32.totalorder %s13, 0
    %p54 = por %p52, %p53
    %p55 = scmp.ne.s32.totalorder %s47, %s49
    %p56 = scmp.eq.s32.totalorder %s18, 1
    %p57 = por %p55, %p56
    %p58 = scmp.ne.s32.totalorder %s49, %s50
    %p59 = scmp.eq.s32.totalorder %s18, 0
    %p60 = por %p58, %p59
    %p61 = scmp.ne.s32.totalorder %s49, %s50
    %p62 = scmp.eq.s32.totalorder %s19, 1
    %p63 = por %p61, %p62
    %p65 = scmp.ne.s32.totalorder %s50, %s64
    %p66 = scmp.eq.s32.totalorder %s19, 0
    %p67 = por %p65, %p66
    %s69 = sadd.s32 %s68, 1
    %p72 = scmp.eq.s32.totalorder %s13, 1
    %p73 = scmp.ne.s32.totalorder %s68, %s70
    %p74 = scmp.eq.s32.totalorder %s13, 0
    %p75 = por %p73, %p74
    %p76 = scmp.ne.s32.totalorder %s68, %s70
    %p77 = scmp.eq.s32.totalorder %s18, 1
    %p78 = por %p76, %p77
    %p79 = scmp.ne.s32.totalorder %s70, %s71
    %p80 = scmp.eq.s32.totalorder %s18, 0
    %p81 = por %p79, %p80
    %p82 = scmp.ne.s32.totalorder %s70, %s71
    %p83 = scmp.eq.s32.totalorder %s19, 1
    %p84 = por %p82, %p83
    %p86 = scmp.ne.s32.totalorder %s71, %s85
    %p87 = scmp.eq.s32.totalorder %s19, 0
    %p88 = por %p86, %p87
    %s90 = sadd.s32 %s89, 1
    %p93 = scmp.eq.s32.totalorder %s13, 1
    %p94 = scmp.ne.s32.totalorder %s89, %s91
    %p95 = scmp.eq.s32.totalorder %s13, 0
    %p96 = por %p94, %p95
    %p97 = scmp.ne.s32.totalorder %s89, %s91
    %p98 = scmp.eq.s32.totalorder %s18, 1
    %p99 = por %p97, %p98
    %p100 = scmp.ne.s32.totalorder %s91, %s92
    %p101 = scmp.eq.s32.totalorder %s18, 0
    %p102 = por %p100, %p101
    %p103 = scmp.ne.s32.totalorder %s91, %s92
    %p104 = scmp.eq.s32.totalorder %s19, 1
    %p105 = por %p103, %p104
    %p107 = scmp.ne.s32.totalorder %s92, %s106
    %p108 = scmp.eq.s32.totalorder %s19, 0
    %p109 = por %p107, %p108
    %s111 = sadd.s32 %s110, 1
    %p114 = scmp.eq.s32.totalorder %s13, 1
    %p115 = scmp.ne.s32.totalorder %s110, %s112
    %p116 = scmp.eq.s32.totalorder %s13, 0
    %p117 = por %p115, %p116
    %p118 = scmp.ne.s32.totalorder %s110, %s112
    %p119 = scmp.eq.s32.totalorder %s18, 1
    %p120 = por %p118, %p119
    %p121 = scmp.ne.s32.totalorder %s112, %s113
    %p122 = scmp.eq.s32.totalorder %s18, 0
    %p123 = por %p121, %p122
    %p124 = scmp.ne.s32.totalorder %s112, %s113
    %p125 = scmp.eq.s32.totalorder %s19, 1
    %p126 = por %p124, %p125
    %p128 = scmp.ne.s32.totalorder %s113, %s127
    %p129 = scmp.eq.s32.totalorder %s19, 0
    %p130 = por %p128, %p129
    %s132 = sadd.s32 %s131, 1
    %p135 = scmp.eq.s32.totalorder %s13, 1
    %p136 = scmp.ne.s32.totalorder %s131, %s133
    %p137 = scmp.eq.s32.totalorder %s13, 0
    %p138 = por %p136, %p137
    %p139 = scmp.ne.s32.totalorder %s131, %s133
    %p140 = scmp.eq.s32.totalorder %s18, 1
    %p141 = por %p139, %p140
    %p142 = scmp.ne.s32.totalorder %s133, %s134
    %p143 = scmp.eq.s32.totalorder %s18, 0
    %p144 = por %p142, %p143
    %p145 = scmp.ne.s32.totalorder %s133, %s134
    %p146 = scmp.eq.s32.totalorder %s19, 1
    %p147 = por %p145, %p146
    %p149 = scmp.ne.s32.totalorder %s134, %s148
    %p150 = scmp.eq.s32.totalorder %s19, 0
    %p151 = por %p149, %p150
    %s153 = sadd.s32 %s152, 1
    %p156 = scmp.eq.s32.totalorder %s13, 1
    %p157 = scmp.ne.s32.totalorder %s152, %s154
    %p158 = scmp.eq.s32.totalorder %s13, 0
    %p159 = por %p157, %p158
    %p160 = scmp.ne.s32.totalorder %s152, %s154
    %p161 = scmp.eq.s32.totalorder %s18, 1
    %p162 = por %p160, %p161
    %p163 = scmp.ne.s32.totalorder %s154, %s155
    %p164 = scmp.eq.s32.totalorder %s18, 0
    %p165 = por %p163, %p164
    %p166 = scmp.ne.s32.totalorder %s154, %s155
    %p167 = scmp.eq.s32.totalorder %s19, 1
    %p168 = por %p166, %p167
    %p170 = scmp.ne.s32.totalorder %s155, %s169
    %p171 = scmp.eq.s32.totalorder %s19, 0
    %p172 = por %p170, %p171
    %s173 = ssub.s32 %s13, %s20
    %p174 = scmp.eq.s32.totalorder %s173, 0
    %s176 = sadd.s32 %s175, 1
    %s177 = scalar_select %p174, %s175, %s176
    %p180 = pneg %p174
    %p181 = scmp.eq.s32.totalorder %s13, 1
    %p182 = por %p180, %p181
    %p183 = scmp.ne.s32.totalorder %s175, %s178
    %p184 = scmp.eq.s32.totalorder %s13, 0
    %p185 = por %p183, %p184
    %p186 = scmp.ne.s32.totalorder %s175, %s178
    %p187 = scmp.eq.s32.totalorder %s18, 1
    %p188 = por %p186, %p187
    %p189 = scmp.ne.s32.totalorder %s178, %s179
    %p190 = scmp.eq.s32.totalorder %s18, 0
    %p191 = por %p189, %p190
    %p192 = scmp.ne.s32.totalorder %s178, %s179
    %p193 = scmp.eq.s32.totalorder %s19, 1
    %p194 = por %p192, %p193
    %p196 = scmp.ne.s32.totalorder %s179, %s195
    %p197 = scmp.eq.s32.totalorder %s19, 0
    %p198 = por %p196, %p197
    %p199 = scmp.le.s32.totalorder 1, %s13
    %p200 = scmp.lt.s32.totalorder %s13, 3
    %p201 = pnand %p199, %p200
    %p202 = pneg %p201
    // Predicated region
    $region9: #{cvblock_forward.1} parent=5 // pred_check
      _
    $region10: #{cvblock_forward.1} parent=5 // pred_check_branch
      %204 = sbr.rel (%p201) target = $region12
    $region11: #{cvblock_forward.1} parent=5 // pred_region
      %s205 = ssub.s32 %s13, 1
      // Predicated region
      $region13: #{cvblock_forward.1} parent=11 // pred_check
        %p206 = pneg %p60
      $region14: #{cvblock_forward.1} parent=11 // pred_check_branch
        %208 = sbr.rel (%p206) target = $region16
      $region15: #{cvblock_forward.1} parent=11 // pred_region
        _
      $region16: #{cvblock_forward.1} parent=11 // pred_fallthru
        _
      // Predicated region
      $region17: #{cvblock_forward.1} parent=11 // pred_check
        %p209 = pneg %p81
      $region18: #{cvblock_forward.1} parent=11 // pred_check_branch
        %211 = sbr.rel (%p209) target = $region20
      $region19: #{cvblock_forward.1} parent=11 // pred_region
        _
      $region20: #{cvblock_forward.1} parent=11 // pred_fallthru
        _
      // Predicated region
      $region21: #{cvblock_forward.1} parent=11 // pred_check
        %p212 = pneg %p102
      $region22: #{cvblock_forward.1} parent=11 // pred_check_branch
        %214 = sbr.rel (%p212) target = $region24
      $region23: #{cvblock_forward.1} parent=11 // pred_region
        _
      $region24: #{cvblock_forward.1} parent=11 // pred_fallthru
        _
      // Predicated region
      $region25: #{cvblock_forward.1} parent=11 // pred_check
        %p215 = pneg %p123
      $region26: #{cvblock_forward.1} parent=11 // pred_check_branch
        %217 = sbr.rel (%p215) target = $region28
      $region27: #{cvblock_forward.1} parent=11 // pred_region
        _
      $region28: #{cvblock_forward.1} parent=11 // pred_fallthru
        _
      // Predicated region
      $region29: #{cvblock_forward.1} parent=11 // pred_check
        %p218 = pneg %p144
      $region30: #{cvblock_forward.1} parent=11 // pred_check_branch
        %220 = sbr.rel (%p218) target = $region32
      $region31: #{cvblock_forward.1} parent=11 // pred_region
        _
      $region32: #{cvblock_forward.1} parent=11 // pred_fallthru
        _
      // Predicated region
      $region33: #{cvblock_forward.1} parent=11 // pred_check
        %p221 = pneg %p165
      $region34: #{cvblock_forward.1} parent=11 // pred_check_branch
        %223 = sbr.rel (%p221) target = $region36
      $region35: #{cvblock_forward.1} parent=11 // pred_region
        _
      $region36: #{cvblock_forward.1} parent=11 // pred_fallthru
        _
    $region12: #{cvblock_forward.1} parent=5 // pred_fallthru
      _
    %p224 = scmp.lt.s32.totalorder %s13, 2
    // Predicated region
    $region37: #{cvblock_forward.1} parent=5 // pred_check
      %p225 = pneg %p224
    $region38: #{cvblock_forward.1} parent=5 // pred_check_branch
      %227 = sbr.rel (%p225) target = $region40
    $region39: #{cvblock_forward.1} parent=5 // pred_region
      // Predicated region
      $region41: #{cvblock_forward.1} parent=39 // pred_check
        %p228 = pneg %p33
      $region42: #{cvblock_forward.1} parent=39 // pred_check_branch
        %230 = sbr.rel (%p228) target = $region44
      $region43: #{cvblock_forward.1} parent=39 // pred_region
        %p231 = scmp.lt.s32.totalorder %s13, 1
        %s232 = scalar_select %p231, %s13, 1
        %s233 = smul.addr %s232, 2
        %s234 = smul.addr %s233, 4
        %s235 = scalar_lea.vmem %s0, %s234
      $region44: #{cvblock_forward.1} parent=39 // pred_fallthru
        _
    $region40: #{cvblock_forward.1} parent=5 // pred_fallthru
      _
    %p236 = scmp.le.s32.totalorder 1, %s13
    %p237 = scmp.lt.s32.totalorder %s13, 3
    %p238 = pnand %p236, %p237
    %p239 = pneg %p238
    // Predicated region
    $region45: #{cvblock_forward.1} parent=5 // pred_check
      _
    $region46: #{cvblock_forward.1} parent=5 // pred_check_branch
      %241 = sbr.rel (%p238) target = $region48
    $region47: #{cvblock_forward.1} parent=5 // pred_region
      %s242 = ssub.s32 %s13, 1
      %p243 = scmp.lt.s32.totalorder %s18, 1
      %s244 = scalar_select %p243, %s18, 1
      %s245 = smul.addr %s244, 2
      %s246 = smul.addr %s245, 4
      %s247 = scalar_lea.vmem %s0, %s246
      %p248 = pneg %p39
      %p249 = pneg %p36
      %p250 = pneg %p60
      %p251 = pneg %p57
      %p252 = pneg %p81
      %p253 = pneg %p78
      %p254 = pneg %p102
      %p255 = pneg %p99
      %p256 = pneg %p123
      %p257 = pneg %p120
      %p258 = pneg %p144
      %p259 = pneg %p141
      %p260 = pneg %p165
      %p261 = pneg %p162
      %p262 = pneg %p191
      %p263 = pneg %p188
      %p264 = scmp.lt.s32.totalorder %s18, 1
      %s265 = scalar_select %p264, %s18, 1
      %s266 = smul.addr %s265, 2
      %s267 = smul.addr %s266, 8
      %s268 = scalar_lea.vmem %s7, %s267
      %p269 = scmp.lt.s32.totalorder %s18, 1
      %s270 = scalar_select %p269, %s18, 1
      %s271 = smul.addr %s270, 2
      %s272 = smul.addr %s271, 4
      %s273 = scalar_lea.vmem %s0, %s272
      %p274 = scmp.lt.s32.totalorder %s18, 1
      %s275 = scalar_select %p274, %s18, 1
      %s276 = smul.addr %s275, 2
      %s277 = smul.addr %s276, 8
      %s278 = scalar_lea.vmem %s7, %s277
      %v280 = vld [vmem:[%s273] sm:$0xff]
      %v281 = vld [vmem:[%s1] sm:$0xf]
      %v282 = vld [vmem:[%s2] sm:$0xff]
      %v283 = vld [vmem:[%s3] sm:$0xff]
      %v284 = vlaneseq
      %v285 = vand.u32 %v284, 127
      %v286 = vadd.s32 %v285, 128
      %v287 = vshra.s32 %v285, 4
      %v288 = vshra.s32 %v286, 4
      %v289 = vand.u32 %v285, 15
      %v290 = vand.u32 %v286, 15
      %v292 = vcombine.high %v280, %v280
      %294 = vrot.lane.b32.xlu0 %v280, 17
      %v295 = vpop.permute.xlu0 %294
      %296 = vrot.lane.b32.xlu0 %v292, 17
      %v297 = vpop.permute.xlu0 %296
      %vm298 = vcmp.lt.s32.totalorder %v285, 17
      %v299 = vsel %vm298, %v295, %v297
      %v300 = vsel %vm298, %v297, %v295
      %vm301 = vcmp.ge.s32.totalorder %v287, 1
      %vm302 = vcmp.ge.s32.totalorder %v288, 1
      %vm303 = vcmp.ge.s32.totalorder %v289, 1
      %vm304 = vcmp.ge.s32.totalorder %v290, 1
      %vm305 = vmand %vm301, %vm303
      %vm306 = vmand %vm302, %vm304
      %v307 = vsel %vm305, 1, 0
      %v308 = vsel %vm306, 1, 0
      %vm309 = vcmp.eq.s32.totalorder %v307, 1
      %vm310 = vcmp.eq.s32.totalorder %v308, 1
      %v311 = vsel %vm309, %v300, 0.0
      %v312 = vsel %vm310, %v299, 0.0
      %313 = vrot.lane.b32.xlu0 %v280, 16
      %v314 = vpop.permute.xlu0 %313
      %315 = vrot.lane.b32.xlu0 %v292, 16
      %v316 = vpop.permute.xlu0 %315
      %vm317 = vcmp.lt.s32.totalorder %v285, 16
      %v318 = vsel %vm317, %v314, %v316
      %v319 = vsel %vm317, %v316, %v314
      %v320 = vsel %vm301, 1, 0
      %v321 = vsel %vm302, 1, 0
      %vm322 = vcmp.eq.s32.totalorder %v320, 1
      %vm323 = vcmp.eq.s32.totalorder %v321, 1
      %v324 = vsel %vm322, %v319, 0.0
      %v325 = vsel %vm323, %v318, 0.0
      %326 = vrot.lane.b32.xlu0 %v280, 15
      %v327 = vpop.permute.xlu0 %326
      %328 = vrot.lane.b32.xlu0 %v292, 15
      %v329 = vpop.permute.xlu0 %328
      %vm330 = vcmp.lt.s32.totalorder %v285, 15
      %v331 = vsel %vm330, %v327, %v329
      %v332 = vsel %vm330, %v329, %v327
      %vm333 = vcmp.lt.s32.totalorder %v289, 15
      %vm334 = vcmp.lt.s32.totalorder %v290, 15
      %vm335 = vmand %vm301, %vm333
      %vm336 = vmand %vm302, %vm334
      %v337 = vsel %vm335, 1, 0
      %v338 = vsel %vm336, 1, 0
      %vm339 = vcmp.eq.s32.totalorder %v337, 1
      %vm340 = vcmp.eq.s32.totalorder %v338, 1
      %v341 = vsel %vm339, %v332, 0.0
      %v342 = vsel %vm340, %v331, 0.0
      %343 = vrot.lane.b32.xlu0 %v280, 1
      %v344 = vpop.permute.xlu0 %343
      %345 = vrot.lane.b32.xlu0 %v292, 1
      %v346 = vpop.permute.xlu0 %345
      %vm347 = vcmp.lt.s32.totalorder %v285, 1
      %v348 = vsel %vm347, %v344, %v346
      %v349 = vsel %vm347, %v346, %v344
      %v350 = vsel %vm303, 1, 0
      %v351 = vsel %vm304, 1, 0
      %vm352 = vcmp.eq.s32.totalorder %v350, 1
      %vm353 = vcmp.eq.s32.totalorder %v351, 1
      %v354 = vsel %vm352, %v349, 0.0
      %v355 = vsel %vm353, %v348, 0.0
      %356 = vrot.lane.b32.xlu0 %v280, 127
      %v357 = vpop.permute.xlu0 %356
      %358 = vrot.lane.b32.xlu0 %v292, 127
      %v359 = vpop.permute.xlu0 %358
      %vm360 = vcmp.lt.s32.totalorder %v285, 127
      %v361 = vsel %vm360, %v357, %v359
      %v362 = vsel %vm360, %v359, %v357
      %v363 = vsel %vm333, 1, 0
      %v364 = vsel %vm334, 1, 0
      %vm365 = vcmp.eq.s32.totalorder %v363, 1
      %vm366 = vcmp.eq.s32.totalorder %v364, 1
      %v367 = vsel %vm365, %v361, 0.0
      %v368 = vsel %vm366, %v362, 0.0
      %369 = vrot.lane.b32.xlu0 %v280, 113
      %v370 = vpop.permute.xlu0 %369
      %371 = vrot.lane.b32.xlu0 %v292, 113
      %v372 = vpop.permute.xlu0 %371
      %vm373 = vcmp.lt.s32.totalorder %v285, 113
      %v374 = vsel %vm373, %v370, %v372
      %v375 = vsel %vm373, %v372, %v370
      %vm376 = vcmp.lt.s32.totalorder %v287, 15
      %vm377 = vcmp.lt.s32.totalorder %v288, 15
      %vm378 = vmand %vm376, %vm303
      %vm379 = vmand %vm377, %vm304
      %v380 = vsel %vm378, 1, 0
      %v381 = vsel %vm379, 1, 0
      %vm382 = vcmp.eq.s32.totalorder %v380, 1
      %vm383 = vcmp.eq.s32.totalorder %v381, 1
      %v384 = vsel %vm382, %v374, 0.0
      %v385 = vsel %vm383, %v375, 0.0
      %386 = vrot.lane.b32.xlu0 %v280, 112
      %v387 = vpop.permute.xlu0 %386
      %388 = vrot.lane.b32.xlu0 %v292, 112
      %v389 = vpop.permute.xlu0 %388
      %vm390 = vcmp.lt.s32.totalorder %v285, 112
      %v391 = vsel %vm390, %v387, %v389
      %v392 = vsel %vm390, %v389, %v387
      %v393 = vsel %vm376, 1, 0
      %v394 = vsel %vm377, 1, 0
      %vm395 = vcmp.eq.s32.totalorder %v393, 1
      %vm396 = vcmp.eq.s32.totalorder %v394, 1
      %v397 = vsel %vm395, %v391, 0.0
      %v398 = vsel %vm396, %v392, 0.0
      %399 = vrot.lane.b32.xlu0 %v280, 111
      %v400 = vpop.permute.xlu0 %399
      %401 = vrot.lane.b32.xlu0 %v292, 111
      %v402 = vpop.permute.xlu0 %401
      %vm403 = vcmp.lt.s32.totalorder %v285, 111
      %v404 = vsel %vm403, %v400, %v402
      %v405 = vsel %vm403, %v402, %v400
      %vm406 = vmand %vm376, %vm333
      %vm407 = vmand %vm377, %vm334
      %v408 = vsel %vm406, 1, 0
      %v409 = vsel %vm407, 1, 0
      %vm410 = vcmp.eq.s32.totalorder %v408, 1
      %vm411 = vcmp.eq.s32.totalorder %v409, 1
      %v412 = vsel %vm410, %v404, 0.0
      %v413 = vsel %vm411, %v405, 0.0
      %v416 = vrot.slane %v324, 4
      %v417 = vrot.slane %v325, 4
      %v422 = vrot.slane %v354, 4
      %v423 = vrot.slane %v355, 4
      %v428 = vrot.slane %v367, 4
      %v429 = vrot.slane %v368, 4
      %v434 = vrot.slane %v397, 4
      %v435 = vrot.slane %v398, 4
      %vm438 = vcmask 1043456
      %v439 = vsel %vm438, %v311, %v416
      %v440 = vsel %vm438, %v312, %v417
      %v441 = vsel %vm438, %v341, %v422
      %v442 = vsel %vm438, %v342, %v423
      %v443 = vsel %vm438, %v280, %v428
      %v444 = vsel %vm438, %v292, %v429
      %v445 = vsel %vm438, %v384, %v434
      %v446 = vsel %vm438, %v385, %v435
      %v447 = vpack.c.bf16 %v441, %v439
      %v448 = vpack.c.bf16 %v442, %v440
      %v449 = vpack.c.bf16 %v445, %v443
      %v450 = vpack.c.bf16 %v446, %v444
      %v451 = vpack.c.bf16 %v412, %v412
      %v452 = vpack.c.bf16 %v413, %v413
      %vm453 = vcmask 293888
      %v455 = vsel %vm453, %v281, 0
      %vm457 = vcmask 1041408
      %v459 = vsel %vm457, %v451, 0
      %v462 = vsel %vm457, %v452, 0
      %464 = vmatprep.subr.bf16.mxu0 %v448
      %465 = vmatpush1.bf16.msra.mxu0 %v447
      %466 = vmatprep.subr.bf16.mxu0 %v450
      %467 = vmatpush1.bf16.msra.mxu0 %v449
      %468 = vmatprep.subr.bf16.mxu0 %v462
      %469 = vmatpush1.bf16.msra.mxu0 %v459
      %470 = vmatprep.subr.bf16.mxu0 0
      %471 = vmatpush1.bf16.msra.mxu0 0
      %472 = vmatprep.subr.bf16.mxu0 0
      %473 = vmatpush1.bf16.msra.mxu0 0
      %474 = vmatprep.subr.bf16.mxu0 0
      %475 = vmatpush1.bf16.msra.mxu0 0
      %476 = vmatprep.subr.bf16.mxu0 0
      %477 = vmatpush1.bf16.msra.mxu0 0
      %478 = vmatprep.subr.bf16.mxu0 0
      %479 = vmatpush1.bf16.msra.mxu0 0
      %480 = vmatprep.subr.bf16.mxu0 0
      %481 = vmatpush1.bf16.msra.mxu0 0
      %482 = vmatprep.subr.bf16.mxu0 0
      %483 = vmatpush1.bf16.msra.mxu0 0
      %484 = vmatprep.subr.bf16.mxu0 0
      %485 = vmatpush1.bf16.msra.mxu0 0
      %486 = vmatprep.subr.bf16.mxu0 0
      %487 = vmatpush1.bf16.msra.mxu0 0
      %488 = vmatprep.subr.bf16.mxu0 0
      %489 = vmatpush1.bf16.msra.mxu0 0
      %490 = vmatprep.subr.bf16.mxu0 0
      %491 = vmatpush1.bf16.msra.mxu0 0
      %492 = vmatprep.subr.bf16.mxu0 0
      %493 = vmatpush1.bf16.msra.mxu0 0
      %494 = vmatprep.subr.bf16.mxu0 0
      %495 = vmatpush1.bf16.msra.mxu0 0
      %496 = vmatprep.mubr.bf16.mxu0 0
      %497 = vmatmul.mubr.bf16.gmra.mrb[0].mxu0 %v455
      %v498 = vpop.f32.mrb[0].mxu0
      %v499 = vadd.f32 0.0, %v498
      %v500 = vpop.f32.mrb[0].mxu0
      %v501 = vadd.f32 0.0, %v500
      %v502 = vpop.f32.mrb[0].mxu0
      %v503 = vpop.f32.mrb[0].mxu0
      %504 = vdwg.mxu0
      %506 = vset.pattern.permute.xlu0 0
      %507 = vperm.xlu0 %506, %v282
      %v508 = vpop.permute.xlu0 %507
      %v510 = vmul.f32 %v499, %v508
      %v511 = vmul.f32 %v501, %v508
      %513 = vset.pattern.permute.xlu0 0
      %514 = vperm.xlu0 %513, %v283
      %v515 = vpop.permute.xlu0 %514
      %v517 = vadd.f32 %v510, %v515
      %v518 = vadd.f32 %v511, %v515
      %v519 = vmax.f32 %v517, 0.0
      %v520 = vmax.f32 %v518, 0.0
      %v521 = vld [vmem:[%s4] sm:$0xf]
      %v522 = vld [vmem:[%s5] sm:$0xff]
      %v523 = vld [vmem:[%s6] sm:$0xff]
      %524 = vrot.lane.b32.xlu0 %v519, 17
      %v525 = vpop.permute.xlu0 %524
      %526 = vrot.lane.b32.xlu0 %v520, 17
      %v527 = vpop.permute.xlu0 %526
      %v528 = vsel %vm298, %v525, %v527
      %v529 = vsel %vm298, %v527, %v525
      %v530 = vsel %vm309, %v529, 0.0
      %v531 = vsel %vm310, %v528, 0.0
      %532 = vrot.lane.b32.xlu0 %v519, 16
      %v533 = vpop.permute.xlu0 %532
      %534 = vrot.lane.b32.xlu0 %v520, 16
      %v535 = vpop.permute.xlu0 %534
      %v536 = vsel %vm317, %v533, %v535
      %v537 = vsel %vm317, %v535, %v533
      %v538 = vsel %vm322, %v537, 0.0
      %v539 = vsel %vm323, %v536, 0.0
      %540 = vrot.lane.b32.xlu0 %v519, 15
      %v541 = vpop.permute.xlu0 %540
      %542 = vrot.lane.b32.xlu0 %v520, 15
      %v543 = vpop.permute.xlu0 %542
      %v544 = vsel %vm330, %v541, %v543
      %v545 = vsel %vm330, %v543, %v541
      %v546 = vsel %vm339, %v545, 0.0
      %v547 = vsel %vm340, %v544, 0.0
      %548 = vrot.lane.b32.xlu0 %v519, 1
      %v549 = vpop.permute.xlu0 %548
      %550 = vrot.lane.b32.xlu0 %v520, 1
      %v551 = vpop.permute.xlu0 %550
      %v552 = vsel %vm347, %v549, %v551
      %v553 = vsel %vm347, %v551, %v549
      %v554 = vsel %vm352, %v553, 0.0
      %v555 = vsel %vm353, %v552, 0.0
      %556 = vrot.lane.b32.xlu0 %v519, 127
      %v557 = vpop.permute.xlu0 %556
      %558 = vrot.lane.b32.xlu0 %v520, 127
      %v559 = vpop.permute.xlu0 %558
      %v560 = vsel %vm360, %v557, %v559
      %v561 = vsel %vm360, %v559, %v557
      %v562 = vsel %vm365, %v560, 0.0
      %v563 = vsel %vm366, %v561, 0.0
      %564 = vrot.lane.b32.xlu0 %v519, 113
      %v565 = vpop.permute.xlu0 %564
      %566 = vrot.lane.b32.xlu0 %v520, 113
      %v567 = vpop.permute.xlu0 %566
      %v568 = vsel %vm373, %v565, %v567
      %v569 = vsel %vm373, %v567, %v565
      %v570 = vsel %vm382, %v568, 0.0
      %v571 = vsel %vm383, %v569, 0.0
      %572 = vrot.lane.b32.xlu0 %v519, 112
      %v573 = vpop.permute.xlu0 %572
      %574 = vrot.lane.b32.xlu0 %v520, 112
      %v575 = vpop.permute.xlu0 %574
      %v576 = vsel %vm390, %v573, %v575
      %v577 = vsel %vm390, %v575, %v573
      %v578 = vsel %vm395, %v576, 0.0
      %v579 = vsel %vm396, %v577, 0.0
      %580 = vrot.lane.b32.xlu0 %v519, 111
      %v581 = vpop.permute.xlu0 %580
      %582 = vrot.lane.b32.xlu0 %v520, 111
      %v583 = vpop.permute.xlu0 %582
      %v584 = vsel %vm403, %v581, %v583
      %v585 = vsel %vm403, %v583, %v581
      %v586 = vsel %vm410, %v584, 0.0
      %v587 = vsel %vm411, %v585, 0.0
      %v588 = vpack.c.bf16 %v538, %v530
      %v589 = vpack.c.bf16 %v539, %v531
      %v590 = vpack.c.bf16 %v554, %v546
      %v591 = vpack.c.bf16 %v555, %v547
      %v592 = vpack.c.bf16 %v562, %v519
      %v593 = vpack.c.bf16 %v563, %v520
      %v594 = vpack.c.bf16 %v578, %v570
      %v595 = vpack.c.bf16 %v579, %v571
      %v596 = vpack.c.bf16 %v586, %v586
      %v597 = vpack.c.bf16 %v587, %v587
      %vm598 = vcmask 588800
      %v600 = vsel %vm598, %v521, 0
      %v603 = vsel %vm438, %v596, 0
      %v606 = vsel %vm438, %v597, 0
      %608 = vmatprep.subr.bf16.mxu0 %v589
      %609 = vmatpush1.bf16.msra.mxu0 %v588
      %610 = vmatprep.subr.bf16.mxu0 %v591
      %611 = vmatpush1.bf16.msra.mxu0 %v590
      %612 = vmatprep.subr.bf16.mxu0 %v593
      %613 = vmatpush1.bf16.msra.mxu0 %v592
      %614 = vmatprep.subr.bf16.mxu0 %v595
      %615 = vmatpush1.bf16.msra.mxu0 %v594
      %616 = vmatprep.subr.bf16.mxu0 %v606
      %617 = vmatpush1.bf16.msra.mxu0 %v603
      %618 = vmatprep.subr.bf16.mxu0 0
      %619 = vmatpush1.bf16.msra.mxu0 0
      %620 = vmatprep.subr.bf16.mxu0 0
      %621 = vmatpush1.bf16.msra.mxu0 0
      %622 = vmatprep.subr.bf16.mxu0 0
      %623 = vmatpush1.bf16.msra.mxu0 0
      %624 = vmatprep.subr.bf16.mxu0 0
      %625 = vmatpush1.bf16.msra.mxu0 0
      %626 = vmatprep.subr.bf16.mxu0 0
      %627 = vmatpush1.bf16.msra.mxu0 0
      %628 = vmatprep.subr.bf16.mxu0 0
      %629 = vmatpush1.bf16.msra.mxu0 0
      %630 = vmatprep.subr.bf16.mxu0 0
      %631 = vmatpush1.bf16.msra.mxu0 0
      %632 = vmatprep.subr.bf16.mxu0 0
      %633 = vmatpush1.bf16.msra.mxu0 0
      %634 = vmatprep.subr.bf16.mxu0 0
      %635 = vmatpush1.bf16.msra.mxu0 0
      %636 = vmatprep.subr.bf16.mxu0 0
      %637 = vmatpush1.bf16.msra.mxu0 0
      %638 = vmatprep.subr.bf16.mxu0 0
      %639 = vmatpush1.bf16.msra.mxu0 0
      %640 = vmatprep.mubr.bf16.mxu0 0
      %641 = vmatmul.mubr.bf16.gmra.mrb[0].mxu0 %v600
      %v642 = vpop.f32.mrb[0].mxu0
      %v643 = vadd.f32 0.0, %v642
      %v644 = vpop.f32.mrb[0].mxu0
      %v645 = vadd.f32 0.0, %v644
      %v646 = vpop.f32.mrb[0].mxu0
      %v647 = vpop.f32.mrb[0].mxu0
      %648 = vdwg.mxu0
      %650 = vset.pattern.permute.xlu0 0
      %651 = vperm.xlu0 %650, %v522
      %v652 = vpop.permute.xlu0 %651
      %v654 = vmul.f32 %v643, %v652
      %v655 = vmul.f32 %v645, %v652
      %657 = vset.pattern.permute.xlu0 0
      %658 = vperm.xlu0 %657, %v523
      %v659 = vpop.permute.xlu0 %658
      %v661 = vadd.f32 %v654, %v659
      %v662 = vadd.f32 %v655, %v659
      %v663 = vmax.f32 %v661, 0.0
      %v664 = vmax.f32 %v662, 0.0
      %665 = vst [vmem:[%s278] sm:$0xff] %v663
      %666 = vst [vmem:[%s278 + $0x8] sm:$0xff] %v664
      %p667 = scmp.lt.s32.totalorder %s18, 1
      %s668 = scalar_select %p667, %s18, 1
      %s669 = smul.addr %s668, 2
      %s670 = smul.addr %s669, 8
      %s671 = scalar_lea.vmem %s7, %s670
      // Predicated region
      $region49: #{cvblock_forward.1} parent=47 // pred_check
        %p672 = pneg %p188
      $region50: #{cvblock_forward.1} parent=47 // pred_check_branch
        %674 = sbr.rel (%p672) target = $region52
      $region51: #{cvblock_forward.1} parent=47 // pred_region
        _
      $region52: #{cvblock_forward.1} parent=47 // pred_fallthru
        _
    $region48: #{cvblock_forward.1} parent=5 // pred_fallthru
      _
    %p675 = scmp.le.s32.totalorder 2, %s13
    // Predicated region
    $region53: #{cvblock_forward.1} parent=5 // pred_check
      %p676 = pneg %p675
    $region54: #{cvblock_forward.1} parent=5 // pred_check_branch
      %678 = sbr.rel (%p676) target = $region56
    $region55: #{cvblock_forward.1} parent=5 // pred_region
      %s679 = ssub.s32 %s13, 2
      // Predicated region
      $region57: #{cvblock_forward.1} parent=55 // pred_check
        %p680 = pneg %p194
      $region58: #{cvblock_forward.1} parent=55 // pred_check_branch
        %682 = sbr.rel (%p680) target = $region60
      $region59: #{cvblock_forward.1} parent=55 // pred_region
        %p683 = scmp.lt.s32.totalorder %s19, 1
        %s684 = scalar_select %p683, %s19, 1
        %s685 = smul.addr %s684, 2
        %s686 = smul.addr %s685, 8
        %s687 = scalar_lea.vmem %s7, %s686
      $region60: #{cvblock_forward.1} parent=55 // pred_fallthru
        _
    $region56: #{cvblock_forward.1} parent=5 // pred_fallthru
      _
  $region6: #{cvblock_forward.1} parent=0 // loop_footer
    %s17 = sadd.s32 1, %s13
  $region7: #{cvblock_forward.1} parent=0 // loop_footer_branch
    %12 = sbr.rel target = $region3
  $region8: #{cvblock_forward.1} parent=0 // loop_exit
    _

</llo_original>
